<compile_context>
chip_gen: v5e
topology: v5e:2x2
jax: 0.10.0
libtpu: 0.0.40
codegen_flags: <defaults>
</compile_context>

<pallas_src>
import jax
import jax.numpy as jnp
from jax.experimental import pallas as pl
from jax.experimental.pallas import tpu as pltpu

IN_FEATURES = 3
OUT_FEATURES = 1
CLAMP_MIN = -4.0
CLAMP_MAX = 4.0

LANE = 128          # TPU lane width
MAX_TILE_B = 8192   # lanes per grid step (review: aim 8192-32768)


def _round_up(v, m):
    return ((v + m - 1) // m) * m


def make_linear_clamp(weight, bias):
    """Prepare parameters once (as immediates); returns fwd(x) for x of shape (B, 3)."""
    w = jnp.asarray(weight, jnp.float32).reshape(IN_FEATURES)
    b = jnp.asarray(bias, jnp.float32).reshape(OUT_FEATURES)
    # Bake as Python-float immediates -> fold straight into the VPU MACs,
    # no SMEM operands / per-call parameter DMA.
    w0, w1, w2 = float(w[0]), float(w[1]), float(w[2])
    b0 = float(b[0])

    def linear_clamp_kernel(x_ref, o_ref):
        # x_ref: (3, TILE_B) VMEM block; o_ref: (1, TILE_B) VMEM block.
        x = x_ref[...]
        # K=3, N=1 contraction as 3 lane-dense VPU multiply-adds (no MXU,
        # no cross-sublane reduce).
        y = x[0:1, :] * w0 + x[1:2, :] * w1 + x[2:3, :] * w2 + b0
        o_ref[...] = jnp.clip(y, CLAMP_MIN, CLAMP_MAX).astype(o_ref.dtype)

    @jax.jit
    def fwd(x):
        # Trace-time dtype check (no extra op when x is already f32).
        if x.dtype != jnp.float32:
            x = x.astype(jnp.float32)
        B = x.shape[0]

        # Static tiling decisions (Python ints at trace time).
        b_pad = _round_up(B, LANE)
        if b_pad <= MAX_TILE_B:
            tile_b = b_pad
        else:
            tile_b = MAX_TILE_B
            b_pad = _round_up(b_pad, MAX_TILE_B)
        grid = (b_pad // tile_b,)

        # Lane-dense relayout: (B, 3) -> (3, B_pad).
        xt = x.T                                   # (3, B)
        if b_pad != B:
            xt = jnp.pad(xt, ((0, 0), (0, b_pad - B)))

        out = pl.pallas_call(
            linear_clamp_kernel,
            out_shape=jax.ShapeDtypeStruct((1, b_pad), jnp.float32),
            grid=grid,
            in_specs=[
                # Sublane dim (3) equals the full array dim -> exempt from the
                # 8-divisibility rule; lane dim is a multiple of 128.
                pl.BlockSpec((IN_FEATURES, tile_b), lambda i: (0, i)),
            ],
            out_specs=pl.BlockSpec((OUT_FEATURES, tile_b), lambda i: (0, i)),
            compiler_params=pltpu.CompilerParams(
                dimension_semantics=("parallel",)),
        )(xt)

        # (1, B_pad) -> (B, 1); slice + reshape of a contiguous row is free.
        return out[0, :B].reshape(B, OUT_FEATURES)

    return fwd


if __name__ == "__main__":
    key = jax.random.PRNGKey(0)
    kx, kw, kb, kx2, kx3 = jax.random.split(key, 5)

    # Deterministic synthetic parameters (shapes from nn.Linear(3, 1)).
    weight = jax.random.normal(kw, (OUT_FEATURES, IN_FEATURES), jnp.float32) * 0.5
    bias = jax.random.normal(kb, (OUT_FEATURES,), jnp.float32) * 0.1

    fwd = make_linear_clamp(weight, bias)

    def ref_fn(x):
        return jnp.clip(x @ weight.T + bias, CLAMP_MIN, CLAMP_MAX)

    # Case 1: the module's example input shape (1, 3).
    x1 = jax.random.normal(kx, (1, IN_FEATURES), jnp.float32)
    out1 = fwd(x1)
    jax.block_until_ready(out1)
    assert out1.shape == (1, OUT_FEATURES), out1.shape
    assert jnp.allclose(out1, ref_fn(x1), atol=1e-5), (out1, ref_fn(x1))

    # Case 2: small batch with values that hit the clamp.
    x4 = jax.random.normal(kx2, (4, IN_FEATURES), jnp.float32) * 5.0
    out4 = fwd(x4)
    jax.block_until_ready(out4)
    assert out4.shape == (4, OUT_FEATURES), out4.shape
    assert jnp.allclose(out4, ref_fn(x4), atol=1e-5), (out4, ref_fn(x4))

    # Case 3: batch that is not a multiple of 128 (exercises the pad path).
    x300 = jax.random.normal(kx3, (300, IN_FEATURES), jnp.float32)
    out300 = fwd(x300)
    jax.block_until_ready(out300)
    assert out300.shape == (300, OUT_FEATURES), out300.shape
    assert jnp.allclose(out300, ref_fn(x300), atol=1e-5)

    print("KERNEL_OK")
</pallas_src>

<mosaic_0001>
module attributes {stable_mosaic.version = 11 : i64} {
  func.func @linear_clamp_kernel(%arg0: i32, %arg1: memref<3x128xf32, #tpu.memory_space<vmem>>, %arg2: memref<1x128xf32, #tpu.memory_space<vmem>>) attributes {dimension_semantics = [#tpu.dimension_semantics<parallel>], iteration_bounds = array<i64: 1>, scalar_prefetch = 0 : i64, scratch_operands = 0 : i64, tpu.core_type = #tpu.core_type<tc>, window_params = [{transform_indices = @transform_0, window_bounds = array<i64: 3, 128>}, {transform_indices = @transform_1, window_bounds = array<i64: 1, 128>}]} {
    %c0 = arith.constant 0 : index
    %c0_0 = arith.constant 0 : index
    %0 = vector.load %arg1[%c0, %c0_0] : memref<3x128xf32, #tpu.memory_space<vmem>>, vector<3x128xf32>
    %1 = vector.extract_strided_slice %0 {offsets = [0, 0], sizes = [1, 128], strides = [1, 1]} : vector<3x128xf32> to vector<1x128xf32>
    %cst = arith.constant -1.22122788 : f32
    %2 = vector.broadcast %cst : f32 to vector<1x128xf32>
    %3 = arith.mulf %1, %2 : vector<1x128xf32>
    %4 = vector.extract_strided_slice %0 {offsets = [1, 0], sizes = [1, 128], strides = [1, 1]} : vector<3x128xf32> to vector<1x128xf32>
    %cst_1 = arith.constant -1.01784027 : f32
    %5 = vector.broadcast %cst_1 : f32 to vector<1x128xf32>
    %6 = arith.mulf %4, %5 : vector<1x128xf32>
    %7 = arith.addf %3, %6 : vector<1x128xf32>
    %8 = vector.extract_strided_slice %0 {offsets = [2, 0], sizes = [1, 128], strides = [1, 1]} : vector<3x128xf32> to vector<1x128xf32>
    %cst_2 = arith.constant 0.102772117 : f32
    %9 = vector.broadcast %cst_2 : f32 to vector<1x128xf32>
    %10 = arith.mulf %8, %9 : vector<1x128xf32>
    %11 = arith.addf %7, %10 : vector<1x128xf32>
    %cst_3 = arith.constant 0.1295636 : f32
    %12 = vector.broadcast %cst_3 : f32 to vector<1x128xf32>
    %13 = arith.addf %11, %12 : vector<1x128xf32>
    %cst_4 = arith.constant -4.000000e+00 : f32
    %cst_5 = arith.constant 4.000000e+00 : f32
    %14 = vector.broadcast %cst_4 : f32 to vector<1x128xf32>
    %15 = arith.maximumf %14, %13 : vector<1x128xf32>
    %16 = vector.broadcast %cst_5 : f32 to vector<1x128xf32>
    %17 = arith.minimumf %16, %15 : vector<1x128xf32>
    %c0_6 = arith.constant 0 : index
    %c0_7 = arith.constant 0 : index
    %18 = vector.load %arg2[%c0_6, %c0_7] : memref<1x128xf32, #tpu.memory_space<vmem>>, vector<1x128xf32>
    tpu.vector_store %arg2[%c0_6, %c0_7], %17 {strides = array<i32>} : memref<1x128xf32, #tpu.memory_space<vmem>>, vector<1x128xf32>,
    return
  }
  func.func @transform_0(%arg0: i32) -> (i32, i32) {
    %c0_i32 = arith.constant 0 : i32
    %c0_i32_0 = arith.constant 0 : i32
    return %c0_i32, %arg0 : i32, i32
  }
  func.func @transform_1(%arg0: i32) -> (i32, i32) {
    %c0_i32 = arith.constant 0 : i32
    %c0_i32_0 = arith.constant 0 : i32
    return %c0_i32, %arg0 : i32, i32
  }
}

</mosaic_0001>

<llo_original>
// kernel: fwd.1
$region0: #{fwd.1}
  #allocation0 [shape = 'u32[]', space=smem, size = 0x4, offset = 0x4, fixed_abs, tag = 'smem constant byte address 0x4 - core index']
  #allocation1 [shape = 'u32[72,128]{1,0:T(1,128)}', space=vmem, size = 0x9000, scoped, tag = 'internal scratch']
  %s0 = inlined_call_operand.vmem [shape: f32[3,128], index: 0, kind: input, shape index: {}]
  %s1 = inlined_call_operand.hbm [shape: f32[1,128], index: 1, kind: output, shape index: {}]
  %s2 = sld [smem:[#allocation0]]
  $region14: #{fwd.1} parent=0
    _
  %s4 = ssub.s32 1, %s2
  %s5 = scalar_select 0, %s4, %s2
  $region1: #{fwd.1} parent=0
    #allocation2 [shape = 'u8[512]{0}', space=vmem, size = 0x400, scoped, tag = 'output window, operand 0, single buffered']
    #allocation3 [shape = 's32[1]{0}', space=sflag, size = 0x4, scoped, tag = 'scoped memory for fwd.1']
    %6 = vsyncpa [#allocation3], 0
    // Predicated region
    $region2: #{fwd.1} parent=1 // pred_check
      _
    $region3: #{fwd.1} parent=1 // pred_check_branch
      %8 = sbr.rel (0) target = $region5
    $region4: #{fwd.1} parent=1 // pred_region
      _
    $region5: #{fwd.1} parent=1 // pred_fallthru
      _
    %v9 = vld [vmem:[%s0] sm:$0x7]
    %v10 = vmul.f32 %v9, -1.2212279
    %v11 = vmul.f32 %v9, -1.0178403
    %v13 = vrot.slane %v11, 1
    %v15 = vadd.f32 %v10, %v13
    %v16 = vmul.f32 %v9, 0.10277212
    %v18 = vrot.slane %v16, 2
    %v20 = vadd.f32 %v15, %v18
    %v21 = vadd.f32 %v20, 0.1295636
    %v22 = vmax.f32 %v21, -4.0
    %v23 = vmin.f32 %v22, 4.0
    %24 = vst [vmem:[#allocation2] sm:$0x1] %v23
    // Predicated region
    $region6: #{fwd.1} parent=1 // pred_check
      _
    $region7: #{fwd.1} parent=1 // pred_check_branch
      %26 = sbr.rel (0) target = $region9
    $region8: #{fwd.1} parent=1 // pred_region
      %28 = vsyncadd [#allocation3], 0
      %s30 = sshll.u32 [#allocation2], 4
      %s31 = int_to_ptr.vmem [resolvable:$true] %s30
      %s32 = sshll.u32 %s1, 4
      %s33 = int_to_ptr.hbm [resolvable:$true] %s32
      %35 = dma.vmem_to_hbm [thread:$0]  %s31, 16, %s33, [#allocation3]
    $region9: #{fwd.1} parent=1 // pred_fallthru
      _
    // Predicated region
    $region10: #{fwd.1} parent=1 // pred_check
      _
    $region11: #{fwd.1} parent=1 // pred_check_branch
      %37 = sbr.rel (0) target = $region13
    $region12: #{fwd.1} parent=1 // pred_region
      %39 = dma.done [#allocation3], 16
    $region13: #{fwd.1} parent=1 // pred_fallthru
      _
    %40 = vsyncpa [#allocation3], 1

</llo_original>
